<compile_context>
chip_gen: v7x
topology: tpu7x:2x2x1
jax: 0.10.0
libtpu: 0.0.40
codegen_flags: <defaults>
</compile_context>

<pallas_src>
import math
from functools import partial

import jax
import jax.numpy as jnp
from jax.experimental import pallas as pl
from jax.experimental.pallas import tpu as pltpu

_INV_SQRT2 = 1.0 / math.sqrt(2.0)


def mlp_kernel(x_ref, w1_ref, b1_ref, w2_ref, b2_ref, o_ref, acc_ref):
    # Grid = (M/tm, 4H/tk); axis 1 is the 4H reduction (last, "arbitrary").
    #   x_ref : (tm, H)   compute dtype (bf16 by default)
    #   w1_ref: (H, tk)   compute dtype     b1_ref: (1, tk) f32
    #   w2_ref: (tk, H)   compute dtype     b2_ref: (1, H)  f32
    #   o_ref : (tm, H)   output dtype      acc_ref: (tm, H) f32 scratch
    k = pl.program_id(1)

    @pl.when(k == 0)
    def _():
        acc_ref[...] = jnp.zeros_like(acc_ref)

    # First matmul slice on the MXU, f32 accumulation; bias added in f32.
    h = jnp.dot(x_ref[...], w1_ref[...], preferred_element_type=jnp.float32)
    h = h + b1_ref[...]
    # Exact GELU (PyTorch nn.GELU default): 0.5 * x * (1 + erf(x / sqrt(2)))
    h = 0.5 * h * (1.0 + jax.lax.erf(h * _INV_SQRT2))
    # Second matmul slice; accumulate the 4H reduction into f32 scratch.
    acc_ref[...] += jnp.dot(h.astype(w2_ref.dtype), w2_ref[...],
                            preferred_element_type=jnp.float32)

    # Epilogue: add b2 once, cast, store lane-dense output tile.
    @pl.when(k == pl.num_programs(1) - 1)
    def _():
        o_ref[...] = (acc_ref[...] + b2_ref[...]).astype(o_ref.dtype)


def _round_up(x, m):
    return ((x + m - 1) // m) * m


def _pick_divisor_tile(total, target, quantum):
    """Largest multiple of `quantum` that divides `total` and is <= target;
    falls back to `total` (a full-extent block is always layout-legal)."""
    t = min(target, total)
    t = (t // quantum) * quantum
    while t >= quantum:
        if total % t == 0:
            return t
        t -= quantum
    return total


@partial(jax.jit, static_argnames=("tm", "tk", "compute_dtype"))
def mlp_pallas(x, w1, b1, w2, b2, *, tm=256, tk=512,
               compute_dtype=jnp.bfloat16):
    # x: (..., H);  w1: (H, 4H);  b1: (1, 4H);  w2: (4H, H);  b2: (1, H)
    orig_shape = x.shape
    H = x.shape[-1]
    M = int(math.prod(x.shape[:-1]))
    H4 = w1.shape[1]

    x2d = x.reshape(M, H)

    # ---- tile selection (adapts to small test shapes; v5e users: tm=128) ---
    tm_eff = min(tm, _round_up(M, 8))          # multiple of 8 (f32 sublane)
    Mp = _round_up(M, tm_eff)
    if Mp != M:
        x2d = jnp.pad(x2d, ((0, Mp - M), (0, 0)))
    tk_eff = _pick_divisor_tile(H4, tk, 128)   # multiple of 128 or full 4H

    grid = (Mp // tm_eff, H4 // tk_eff)

    # MXU operands in compute dtype; biases and accumulation stay f32.
    xc = x2d.astype(compute_dtype)
    w1c = w1.astype(compute_dtype)
    w2c = w2.astype(compute_dtype)
    b1f = b1.astype(jnp.float32)
    b2f = b2.astype(jnp.float32)

    cbytes = jnp.dtype(compute_dtype).itemsize
    obytes = jnp.dtype(x.dtype).itemsize

    # Explicit VMEM budget: double-buffered ins/outs + f32 accumulator scratch.
    vmem_needed = (
        2 * (tm_eff * H + H * tk_eff + tk_eff * H) * cbytes   # x, W1, W2 tiles
        + 2 * (tk_eff + H) * 4                                # b1, b2 (f32)
        + 2 * tm_eff * H * obytes                             # output tile
        + tm_eff * H * 4                                      # accumulator
    )
    vmem_limit = min(max(int(vmem_needed * 1.5), 16 * 1024 * 1024),
                     64 * 1024 * 1024)

    cost = pl.CostEstimate(
        flops=4 * Mp * H * H4,                 # two matmuls: 2*M*H*4H each
        transcendentals=Mp * H4,               # erf per hidden element
        bytes_accessed=(xc.size * cbytes + w1c.size * cbytes
                        + w2c.size * cbytes + b1f.size * 4 + b2f.size * 4
                        + Mp * H * obytes),
    )

    out2d = pl.pallas_call(
        mlp_kernel,
        out_shape=jax.ShapeDtypeStruct((Mp, H), x.dtype),
        grid_spec=pltpu.PrefetchScalarGridSpec(
            num_scalar_prefetch=0,
            grid=grid,
            in_specs=[
                pl.BlockSpec((tm_eff, H), lambda i, k: (i, 0)),    # x rows
                pl.BlockSpec((H, tk_eff), lambda i, k: (0, k)),    # W1 k-slice
                pl.BlockSpec((1, tk_eff), lambda i, k: (0, k)),    # b1 k-slice
                pl.BlockSpec((tk_eff, H), lambda i, k: (k, 0)),    # W2 k-slice
                pl.BlockSpec((1, H), lambda i, k: (0, 0)),         # b2
            ],
            out_specs=pl.BlockSpec((tm_eff, H), lambda i, k: (i, 0)),
            scratch_shapes=[pltpu.VMEM((tm_eff, H), jnp.float32)],
        ),
        compiler_params=pltpu.CompilerParams(
            dimension_semantics=("parallel", "arbitrary"),
            vmem_limit_bytes=vmem_limit),
        cost_estimate=cost,
    )(xc, w1c, b1f, w2c, b2f)

    if Mp != M:
        out2d = out2d[:M]
    return out2d.reshape(orig_shape)


def init_params(key, hidden_size):
    # Mimic nn.Linear default init: U(-1/sqrt(fan_in), 1/sqrt(fan_in)).
    h, h4 = hidden_size, 4 * hidden_size
    k1, k2, k3, k4 = jax.random.split(key, 4)
    bound1 = 1.0 / math.sqrt(h)
    bound2 = 1.0 / math.sqrt(h4)
    w1 = jax.random.uniform(k1, (h, h4), jnp.float32, -bound1, bound1)  # (in, out)
    b1 = jax.random.uniform(k2, (1, h4), jnp.float32, -bound1, bound1)
    w2 = jax.random.uniform(k3, (h4, h), jnp.float32, -bound2, bound2)  # (in, out)
    b2 = jax.random.uniform(k4, (1, h), jnp.float32, -bound2, bound2)
    return w1, b1, w2, b2


def mlp_ref(x, w1, b1, w2, b2, compute_dtype=jnp.bfloat16):
    # Pure-JAX reference mirroring the kernel's numerics (bf16 MXU operands,
    # f32 accumulation / bias / GELU).
    cd = compute_dtype
    h = jnp.dot(x.astype(cd), w1.astype(cd),
                preferred_element_type=jnp.float32) + b1.astype(jnp.float32)
    h = 0.5 * h * (1.0 + jax.lax.erf(h * _INV_SQRT2))
    y = jnp.dot(h.astype(cd), w2.astype(cd),
                preferred_element_type=jnp.float32) + b2.astype(jnp.float32)
    return y.astype(x.dtype)


if __name__ == "__main__":
    B, S, H = 2, 8, 32
    key = jax.random.PRNGKey(0)
    kx, kp = jax.random.split(key)
    x = jax.random.normal(kx, (B, S, H), jnp.float32)
    w1, b1, w2, b2 = init_params(kp, H)

    out = mlp_pallas(x, w1, b1, w2, b2)
    out = jax.block_until_ready(out)

    ref = mlp_ref(x, w1, b1, w2, b2)
    assert out.shape == (B, S, H)
    assert jnp.allclose(out, ref, atol=1e-3, rtol=1e-3), "mismatch vs reference"
    print("KERNEL_OK")
</pallas_src>

<mosaic_0001>
module attributes {stable_mosaic.version = 11 : i64} {
  func.func @mlp_kernel(%arg0: i32, %arg1: i32, %arg2: memref<16x32xbf16, #tpu.memory_space<vmem>>, %arg3: memref<32x128xbf16, #tpu.memory_space<vmem>>, %arg4: memref<1x128xf32, #tpu.memory_space<vmem>>, %arg5: memref<128x32xbf16, #tpu.memory_space<vmem>>, %arg6: memref<1x32xf32, #tpu.memory_space<vmem>>, %arg7: memref<16x32xf32, #tpu.memory_space<vmem>>, %arg8: memref<16x32xf32, #tpu.memory_space<vmem>>) attributes {dimension_semantics = [#tpu.dimension_semantics<parallel>, #tpu.dimension_semantics<arbitrary>], iteration_bounds = array<i64: 1, 1>, scalar_prefetch = 0 : i64, scratch_operands = 1 : i64, tpu.core_type = #tpu.core_type<tc>, window_params = [{transform_indices = @transform_0, window_bounds = array<i64: 16, 32>}, {transform_indices = @transform_1, window_bounds = array<i64: 32, 128>}, {transform_indices = @transform_2, window_bounds = array<i64: 1, 128>}, {transform_indices = @transform_3, window_bounds = array<i64: 128, 32>}, {pipeline_mode = #tpu.pipeline_mode<synchronous>, transform_indices = @transform_4, window_bounds = array<i64: 1, 32>}, {transform_indices = @transform_5, window_bounds = array<i64: 16, 32>}]} {
    %c0_i32 = arith.constant 0 : i32
    %0 = arith.cmpi eq, %arg1, %c0_i32 : i32
    %1 = arith.extui %0 : i1 to i32
    %c0_i32_0 = arith.constant 0 : i32
    %2 = arith.cmpi ne, %1, %c0_i32_0 : i32
    scf.if %2 {
      %cst_18 = arith.constant 0.000000e+00 : f32
      %26 = vector.broadcast %cst_18 : f32 to vector<16x32xf32>
      %c0_19 = arith.constant 0 : index
      %c0_20 = arith.constant 0 : index
      %27 = vector.load %arg8[%c0_19, %c0_20] : memref<16x32xf32, #tpu.memory_space<vmem>>, vector<16x32xf32>
      tpu.vector_store %arg8[%c0_19, %c0_20], %26 {strides = array<i32>} : memref<16x32xf32, #tpu.memory_space<vmem>>, vector<16x32xf32>,
    } else {
    }
    %c0 = arith.constant 0 : index
    %c0_1 = arith.constant 0 : index
    %3 = vector.load %arg2[%c0, %c0_1] : memref<16x32xbf16, #tpu.memory_space<vmem>>, vector<16x32xbf16>
    %c0_2 = arith.constant 0 : index
    %c0_3 = arith.constant 0 : index
    %4 = vector.load %arg3[%c0_2, %c0_3] : memref<32x128xbf16, #tpu.memory_space<vmem>>, vector<32x128xbf16>
    %cst = arith.constant dense<0.000000e+00> : vector<16x128xf32>
    %5 = tpu.matmul %3, %4, %cst {dimension_numbers = #tpu.dot_dimension_numbers<[1], [0], [0], [1], [0, 0, 1, 1], [], []>} : vector<16x32xbf16>, vector<32x128xbf16>, vector<16x128xf32> -> vector<16x128xf32>
    %c0_4 = arith.constant 0 : index
    %c0_5 = arith.constant 0 : index
    %6 = vector.load %arg4[%c0_4, %c0_5] : memref<1x128xf32, #tpu.memory_space<vmem>>, vector<1x128xf32>
    %7 = vector.broadcast %6 : vector<1x128xf32> to vector<16x128xf32>
    %8 = arith.addf %5, %7 : vector<16x128xf32>
    %cst_6 = arith.constant 5.000000e-01 : f32
    %9 = vector.broadcast %cst_6 : f32 to vector<16x128xf32>
    %10 = arith.mulf %9, %8 : vector<16x128xf32>
    %cst_7 = arith.constant 0.707106769 : f32
    %11 = vector.broadcast %cst_7 : f32 to vector<16x128xf32>
    %12 = arith.mulf %8, %11 : vector<16x128xf32>
    %13 = math.erf %12 : vector<16x128xf32>
    %cst_8 = arith.constant 1.000000e+00 : f32
    %14 = vector.broadcast %cst_8 : f32 to vector<16x128xf32>
    %15 = arith.addf %14, %13 : vector<16x128xf32>
    %16 = arith.mulf %10, %15 : vector<16x128xf32>
    %c0_9 = arith.constant 0 : index
    %c0_10 = arith.constant 0 : index
    %17 = vector.load %arg8[%c0_9, %c0_10] : memref<16x32xf32, #tpu.memory_space<vmem>>, vector<16x32xf32>
    %18 = arith.truncf %16 : vector<16x128xf32> to vector<16x128xbf16>
    %c0_11 = arith.constant 0 : index
    %c0_12 = arith.constant 0 : index
    %19 = vector.load %arg5[%c0_11, %c0_12] : memref<128x32xbf16, #tpu.memory_space<vmem>>, vector<128x32xbf16>
    %cst_13 = arith.constant dense<0.000000e+00> : vector<16x32xf32>
    %20 = tpu.matmul %18, %19, %cst_13 {dimension_numbers = #tpu.dot_dimension_numbers<[1], [0], [0], [1], [0, 0, 1, 1], [], []>} : vector<16x128xbf16>, vector<128x32xbf16>, vector<16x32xf32> -> vector<16x32xf32>
    %21 = arith.addf %17, %20 : vector<16x32xf32>
    %c0_14 = arith.constant 0 : index
    %c0_15 = arith.constant 0 : index
    %22 = vector.load %arg8[%c0_14, %c0_15] : memref<16x32xf32, #tpu.memory_space<vmem>>, vector<16x32xf32>
    tpu.vector_store %arg8[%c0_14, %c0_15], %21 {strides = array<i32>} : memref<16x32xf32, #tpu.memory_space<vmem>>, vector<16x32xf32>,
    %c0_i32_16 = arith.constant 0 : i32
    %23 = arith.cmpi eq, %arg1, %c0_i32_16 : i32
    %24 = arith.extui %23 : i1 to i32
    %c0_i32_17 = arith.constant 0 : i32
    %25 = arith.cmpi ne, %24, %c0_i32_17 : i32
    scf.if %25 {
      %c0_18 = arith.constant 0 : index
      %c0_19 = arith.constant 0 : index
      %26 = vector.load %arg8[%c0_18, %c0_19] : memref<16x32xf32, #tpu.memory_space<vmem>>, vector<16x32xf32>
      %c0_20 = arith.constant 0 : index
      %c0_21 = arith.constant 0 : index
      %27 = vector.load %arg6[%c0_20, %c0_21] : memref<1x32xf32, #tpu.memory_space<vmem>>, vector<1x32xf32>
      %28 = vector.broadcast %27 : vector<1x32xf32> to vector<16x32xf32>
      %29 = arith.addf %26, %28 : vector<16x32xf32>
      %c0_22 = arith.constant 0 : index
      %c0_23 = arith.constant 0 : index
      %30 = vector.load %arg7[%c0_22, %c0_23] : memref<16x32xf32, #tpu.memory_space<vmem>>, vector<16x32xf32>
      tpu.vector_store %arg7[%c0_22, %c0_23], %29 {strides = array<i32>} : memref<16x32xf32, #tpu.memory_space<vmem>>, vector<16x32xf32>,
    } else {
    }
    return
  }
  func.func @transform_0(%arg0: i32, %arg1: i32) -> (i32, i32) {
    %c0_i32 = arith.constant 0 : i32
    %c0_i32_0 = arith.constant 0 : i32
    return %arg0, %c0_i32 : i32, i32
  }
  func.func @transform_1(%arg0: i32, %arg1: i32) -> (i32, i32) {
    %c0_i32 = arith.constant 0 : i32
    %c0_i32_0 = arith.constant 0 : i32
    return %c0_i32, %arg1 : i32, i32
  }
  func.func @transform_2(%arg0: i32, %arg1: i32) -> (i32, i32) {
    %c0_i32 = arith.constant 0 : i32
    %c0_i32_0 = arith.constant 0 : i32
    return %c0_i32, %arg1 : i32, i32
  }
  func.func @transform_3(%arg0: i32, %arg1: i32) -> (i32, i32) {
    %c0_i32 = arith.constant 0 : i32
    %c0_i32_0 = arith.constant 0 : i32
    return %arg1, %c0_i32 : i32, i32
  }
  func.func @transform_4(%arg0: i32, %arg1: i32) -> (i32, i32) {
    %c0_i32 = arith.constant 0 : i32
    %c0_i32_0 = arith.constant 0 : i32
    %c0_i32_1 = arith.constant 0 : i32
    return %c0_i32, %c0_i32_0 : i32, i32
  }
  func.func @transform_5(%arg0: i32, %arg1: i32) -> (i32, i32) {
    %c0_i32 = arith.constant 0 : i32
    %c0_i32_0 = arith.constant 0 : i32
    return %arg0, %c0_i32 : i32, i32
  }
}

</mosaic_0001>

<llo_original>
// kernel: mlp_pallas.1
$region0: #{mlp_pallas.1}
  #allocation0 [shape = 'u32[]', space=smem, size = 0x4, offset = 0x4, fixed_abs, tag = 'smem constant byte address 0x4 - core index']
  #allocation1 [shape = 'u32[144,128]{1,0:T(1,128)}', space=vmem, size = 0x12000, scoped, tag = 'internal scratch']
  #allocation2 [shape = 'f32[16,32]{1,0:T(8,128)}', space=vmem, size = 0x2000, scoped, tag = 'scratch operand']
  %s0 = inlined_call_operand.vmem [shape: bf16[16,32], index: 0, kind: input, shape index: {}]
  %s1 = inlined_call_operand.vmem [shape: bf16[32,128], index: 1, kind: input, shape index: {}]
  %s2 = inlined_call_operand.vmem [shape: f32[1,128], index: 2, kind: input, shape index: {}]
  %s3 = inlined_call_operand.vmem [shape: bf16[128,32], index: 3, kind: input, shape index: {}]
  %s4 = inlined_call_operand.vmem [shape: f32[1,32], index: 4, kind: input, shape index: {}]
  %s5 = inlined_call_operand.hbm [shape: f32[16,32], index: 5, kind: output, shape index: {}]
  %s6 = sld [smem:[#allocation0]]
  $region38: #{mlp_pallas.1} parent=0
    _
  %s8 = ssub.s32 1, %s6
  %s9 = scalar_select 0, %s8, %s6
  $region1: #{mlp_pallas.1} parent=0
    #allocation3 [shape = 'u8[8192]{0}', space=vmem, size = 0x2000, scoped, tag = 'output window, operand 0, single buffered']
    #allocation4 [shape = 's32[1]{0}', space=sflag, size = 0x4, scoped, tag = 'scoped memory for mlp_pallas.1']
    %10 = vsyncpa [#allocation4], 0
    // Predicated region
    $region2: #{mlp_pallas.1} parent=1 // pred_check
      _
    $region3: #{mlp_pallas.1} parent=1 // pred_check_branch
      %12 = sbr.rel (0) target = $region5
    $region4: #{mlp_pallas.1} parent=1 // pred_region
      _
    $region5: #{mlp_pallas.1} parent=1 // pred_fallthru
      _
    // Predicated region
    $region6: #{mlp_pallas.1} parent=1 // pred_check
      _
    $region7: #{mlp_pallas.1} parent=1 // pred_check_branch
      %14 = sbr.rel (0) target = $region9
    $region8: #{mlp_pallas.1} parent=1 // pred_region
      _
    $region9: #{mlp_pallas.1} parent=1 // pred_fallthru
      _
    // Predicated region
    $region10: #{mlp_pallas.1} parent=1 // pred_check
      _
    $region11: #{mlp_pallas.1} parent=1 // pred_check_branch
      %16 = sbr.rel (0) target = $region13
    $region12: #{mlp_pallas.1} parent=1 // pred_region
      _
    $region13: #{mlp_pallas.1} parent=1 // pred_fallthru
      _
    // Predicated region
    $region14: #{mlp_pallas.1} parent=1 // pred_check
      _
    $region15: #{mlp_pallas.1} parent=1 // pred_check_branch
      %18 = sbr.rel (0) target = $region17
    $region16: #{mlp_pallas.1} parent=1 // pred_region
      _
    $region17: #{mlp_pallas.1} parent=1 // pred_fallthru
      _
    // Predicated region
    $region18: #{mlp_pallas.1} parent=1 // pred_check
      _
    $region19: #{mlp_pallas.1} parent=1 // pred_check_branch
      %20 = sbr.rel (0) target = $region21
    $region20: #{mlp_pallas.1} parent=1 // pred_region
      _
    $region21: #{mlp_pallas.1} parent=1 // pred_fallthru
      _
    %p22 = scmp.eq.s32.totalorder 0, 0
    // Predicated region
    $region22: #{mlp_pallas.1} parent=1 // pred_check
      %p23 = pneg %p22
    $region23: #{mlp_pallas.1} parent=1 // pred_check_branch
      %25 = sbr.rel (%p23) target = $region25
    $region24: #{mlp_pallas.1} parent=1 // pred_region
      %vm26 = vcmask 261120
      %27 = vst.msk [vmem:[#allocation2] sm:$0xff] %vm26, 0.0
      %28 = vst.msk [vmem:[#allocation2 + $0x8] sm:$0xff] %vm26, 0.0
    $region25: #{mlp_pallas.1} parent=1 // pred_fallthru
      _
    %v29 = vld [vmem:[%s0] sm:$0xf]
    %v30 = vld [vmem:[%s0 + $0x4] sm:$0xf]
    %v31 = vld [vmem:[%s1] sm:$0xf]
    %v32 = vld [vmem:[%s1 + $0x4] sm:$0xf]
    %v33 = vld [vmem:[%s1 + $0x8] sm:$0xf]
    %v34 = vld [vmem:[%s1 + $0xc] sm:$0xf]
    %v35 = vld [vmem:[%s2] sm:$0x1]
    %v37 = vlaneseq
    %v38 = vshrl.u32 %v37, 7
    %v39 = vsub.s32 0, %v38
    %v40 = vrot.slane %v35, %v39
    %v44 = vunpack.c.l.b16 %v29
    %v45 = vunpack.c.l.b16 %v30
    %v46 = vpack.c.b16 %v45, %v44
    %v51 = vunpack.c.l.b16 %v31
    %v52 = vunpack.c.l.b16 %v32
    %v53 = vunpack.c.l.b16 %v33
    %v54 = vunpack.c.l.b16 %v34
    %v55 = vpack.c.b16 %v52, %v51
    %v56 = vpack.c.b16 %v54, %v53
    %vm59 = vcmask 261120
    %v61 = vsel %vm59, %v46, 0
    %63 = vmatprep.subr.bf16.mxu0 0
    %64 = vmatpush1.bf16.msra.mxu0 %v55
    %65 = vmatprep.subr.bf16.mxu0 0
    %66 = vmatpush1.bf16.msra.mxu0 %v56
    %67 = vmatprep.subr.bf16.mxu0 0
    %68 = vmatpush1.bf16.msra.mxu0 0
    %69 = vmatprep.subr.bf16.mxu0 0
    %70 = vmatpush1.bf16.msra.mxu0 0
    %71 = vmatprep.subr.bf16.mxu0 0
    %72 = vmatpush1.bf16.msra.mxu0 0
    %73 = vmatprep.subr.bf16.mxu0 0
    %74 = vmatpush1.bf16.msra.mxu0 0
    %75 = vmatprep.subr.bf16.mxu0 0
    %76 = vmatpush1.bf16.msra.mxu0 0
    %77 = vmatprep.subr.bf16.mxu0 0
    %78 = vmatpush1.bf16.msra.mxu0 0
    %79 = vmatprep.subr.bf16.mxu0 0
    %80 = vmatpush1.bf16.msra.mxu0 0
    %81 = vmatprep.subr.bf16.mxu0 0
    %82 = vmatpush1.bf16.msra.mxu0 0
    %83 = vmatprep.subr.bf16.mxu0 0
    %84 = vmatpush1.bf16.msra.mxu0 0
    %85 = vmatprep.subr.bf16.mxu0 0
    %86 = vmatpush1.bf16.msra.mxu0 0
    %87 = vmatprep.subr.bf16.mxu0 0
    %88 = vmatpush1.bf16.msra.mxu0 0
    %89 = vmatprep.subr.bf16.mxu0 0
    %90 = vmatpush1.bf16.msra.mxu0 0
    %91 = vmatprep.subr.bf16.mxu0 0
    %92 = vmatpush1.bf16.msra.mxu0 0
    %93 = vmatprep.subr.bf16.mxu0 0
    %94 = vmatpush1.bf16.msra.mxu0 0
    %95 = vmatprep.mubr.bf16.mxu0 0
    %96 = vmatmul.mubr.bf16.gmra.mrb[0].mxu0 %v61
    %v97 = vpop.f32.mrb[0].mxu0
    %v98 = vadd.f32 %v40, %v97
    %v99 = vpop.f32.mrb[0].mxu0
    %v100 = vpop.f32.mrb[0].mxu0
    %v101 = vadd.f32 %v40, %v100
    %v102 = vpop.f32.mrb[0].mxu0
    %103 = vdwg.mxu0
    %v104 = vmul.f32 %v98, 0.5
    %v105 = vmul.f32 %v101, 0.5
    %v106 = vmul.f32 %v98, 0.70710677
    %v107 = vmul.f32 %v101, 0.70710677
    %v108 = verf.f32.pop %v106
    %v109 = verf.f32.pop %v107
    %v110 = vadd.f32 %v108, 1.0
    %v111 = vadd.f32 %v109, 1.0
    %v112 = vmul.f32 %v104, %v110
    %v113 = vmul.f32 %v105, %v111
    %v114 = vld [vmem:[#allocation2] sm:$0xff]
    %v115 = vld [vmem:[#allocation2 + $0x8] sm:$0xff]
    %v116 = vpack.c.bf16 %v113, %v112
    %v117 = vld [vmem:[%s3] sm:$0xf]
    %v118 = vld [vmem:[%s3 + $0x4] sm:$0xf]
    %v119 = vld [vmem:[%s3 + $0x8] sm:$0xf]
    %v120 = vld [vmem:[%s3 + $0xc] sm:$0xf]
    %v121 = vld [vmem:[%s3 + $0x10] sm:$0xf]
    %v122 = vld [vmem:[%s3 + $0x14] sm:$0xf]
    %v123 = vld [vmem:[%s3 + $0x18] sm:$0xf]
    %v124 = vld [vmem:[%s3 + $0x1c] sm:$0xf]
    %v125 = vld [vmem:[%s3 + $0x20] sm:$0xf]
    %v126 = vld [vmem:[%s3 + $0x24] sm:$0xf]
    %v127 = vld [vmem:[%s3 + $0x28] sm:$0xf]
    %v128 = vld [vmem:[%s3 + $0x2c] sm:$0xf]
    %v129 = vld [vmem:[%s3 + $0x30] sm:$0xf]
    %v130 = vld [vmem:[%s3 + $0x34] sm:$0xf]
    %v131 = vld [vmem:[%s3 + $0x38] sm:$0xf]
    %v132 = vld [vmem:[%s3 + $0x3c] sm:$0xf]
    %v149 = vunpack.c.l.b16 %v117
    %v150 = vunpack.c.l.b16 %v118
    %v151 = vunpack.c.l.b16 %v119
    %v152 = vunpack.c.l.b16 %v120
    %v153 = vunpack.c.l.b16 %v121
    %v154 = vunpack.c.l.b16 %v122
    %v155 = vunpack.c.l.b16 %v123
    %v156 = vunpack.c.l.b16 %v124
    %v157 = vunpack.c.l.b16 %v125
    %v158 = vunpack.c.l.b16 %v126
    %v159 = vunpack.c.l.b16 %v127
    %v160 = vunpack.c.l.b16 %v128
    %v161 = vunpack.c.l.b16 %v129
    %v162 = vunpack.c.l.b16 %v130
    %v163 = vunpack.c.l.b16 %v131
    %v164 = vunpack.c.l.b16 %v132
    %v165 = vpack.c.b16 %v150, %v149
    %v166 = vpack.c.b16 %v152, %v151
    %v167 = vpack.c.b16 %v154, %v153
    %v168 = vpack.c.b16 %v156, %v155
    %v169 = vpack.c.b16 %v158, %v157
    %v170 = vpack.c.b16 %v160, %v159
    %v171 = vpack.c.b16 %v162, %v161
    %v172 = vpack.c.b16 %v164, %v163
    %181 = vmatprep.subr.bf16.mxu0 0
    %182 = vmatpush1.bf16.msra.mxu0 %v165
    %183 = vmatprep.subr.bf16.mxu0 0
    %184 = vmatpush1.bf16.msra.mxu0 %v166
    %185 = vmatprep.subr.bf16.mxu0 0
    %186 = vmatpush1.bf16.msra.mxu0 %v167
    %187 = vmatprep.subr.bf16.mxu0 0
    %188 = vmatpush1.bf16.msra.mxu0 %v168
    %189 = vmatprep.subr.bf16.mxu0 0
    %190 = vmatpush1.bf16.msra.mxu0 %v169
    %191 = vmatprep.subr.bf16.mxu0 0
    %192 = vmatpush1.bf16.msra.mxu0 %v170
    %193 = vmatprep.subr.bf16.mxu0 0
    %194 = vmatpush1.bf16.msra.mxu0 %v171
    %195 = vmatprep.subr.bf16.mxu0 0
    %196 = vmatpush1.bf16.msra.mxu0 %v172
    %197 = vmatprep.subr.bf16.mxu0 0
    %198 = vmatpush1.bf16.msra.mxu0 0
    %199 = vmatprep.subr.bf16.mxu0 0
    %200 = vmatpush1.bf16.msra.mxu0 0
    %201 = vmatprep.subr.bf16.mxu0 0
    %202 = vmatpush1.bf16.msra.mxu0 0
    %203 = vmatprep.subr.bf16.mxu0 0
    %204 = vmatpush1.bf16.msra.mxu0 0
    %205 = vmatprep.subr.bf16.mxu0 0
    %206 = vmatpush1.bf16.msra.mxu0 0
    %207 = vmatprep.subr.bf16.mxu0 0
    %208 = vmatpush1.bf16.msra.mxu0 0
    %209 = vmatprep.subr.bf16.mxu0 0
    %210 = vmatpush1.bf16.msra.mxu0 0
    %211 = vmatprep.subr.bf16.mxu0 0
    %212 = vmatpush1.bf16.msra.mxu0 0
    %213 = vmatprep.mubr.bf16.mxu0 0
    %214 = vmatmul.mubr.bf16.gmra.mrb[0].mxu0 %v116
    %v215 = vpop.f32.mrb[0].mxu0
    %v216 = vadd.f32 0.0, %v215
    %v217 = vpop.f32.mrb[0].mxu0
    %v218 = vpop.f32.mrb[0].mxu0
    %v219 = vadd.f32 0.0, %v218
    %v220 = vpop.f32.mrb[0].mxu0
    %221 = vdwg.mxu0
    %v222 = vadd.f32 %v114, %v216
    %v223 = vadd.f32 %v115, %v219
    %224 = vst.msk [vmem:[#allocation2] sm:$0xff] %vm59, %v222
    %225 = vst.msk [vmem:[#allocation2 + $0x8] sm:$0xff] %vm59, %v223
    // Predicated region
    $region26: #{mlp_pallas.1} parent=1 // pred_check
      %p226 = pneg %p22
    $region27: #{mlp_pallas.1} parent=1 // pred_check_branch
      %228 = sbr.rel (%p226) target = $region29
    $region28: #{mlp_pallas.1} parent=1 // pred_region
      %v229 = vld [vmem:[#allocation2] sm:$0xff]
      %v230 = vld [vmem:[#allocation2 + $0x8] sm:$0xff]
      %v231 = vld [vmem:[%s4] sm:$0x1]
      %v233 = vlaneseq
      %v234 = vshrl.u32 %v233, 7
      %v235 = vsub.s32 0, %v234
      %v236 = vrot.slane %v231, %v235
      %v238 = vadd.f32 %v229, %v236
      %v239 = vadd.f32 %v230, %v236
      %240 = vst.msk [vmem:[#allocation3] sm:$0xff] %vm59, %v238
      %241 = vst.msk [vmem:[#allocation3 + $0x8] sm:$0xff] %vm59, %v239
    $region29: #{mlp_pallas.1} parent=1 // pred_fallthru
      _
    // Predicated region
    $region30: #{mlp_pallas.1} parent=1 // pred_check
      _
    $region31: #{mlp_pallas.1} parent=1 // pred_check_branch
      %243 = sbr.rel (0) target = $region33
    $region32: #{mlp_pallas.1} parent=1 // pred_region
      %s245 = ssub.s32 256, 256
      %246 = vsyncadd [#allocation4], %s245
      %s247 = sshll.u32 [#allocation3], 4
      %s248 = int_to_ptr.vmem [resolvable:$true] %s247
      %253 = dma.vmem_to_hbm [thread:$0]  %s248, 256, %s5, [#allocation4], 128, 128, 8
    $region33: #{mlp_pallas.1} parent=1 // pred_fallthru
      _
    // Predicated region
    $region34: #{mlp_pallas.1} parent=1 // pred_check
      _
    $region35: #{mlp_pallas.1} parent=1 // pred_check_branch
      %255 = sbr.rel (0) target = $region37
    $region36: #{mlp_pallas.1} parent=1 // pred_region
      %256 = dma.done [#allocation4], 256
    $region37: #{mlp_pallas.1} parent=1 // pred_fallthru
      _
    %257 = vsyncpa [#allocation4], 1

</llo_original>
